<compile_context>
chip_gen: v6e
topology: v6e:2x2x1
jax: 0.10.0
libtpu: 0.0.40
codegen_flags: <defaults>
</compile_context>

<pallas_src>
import math

import jax
import jax.numpy as jnp
from jax.experimental import pallas as pl
from jax.experimental.pallas import tpu as pltpu

_INV_SQRT2 = 1.0 / math.sqrt(2.0)


def _ffn_kernel(x_ref, w1_ref, b1_ref, w2_ref, b2_ref, o_ref, acc_ref):
    """One (row-tile i, hidden-chunk k) step of  y = gelu(x @ W1 + b1) @ W2 + b2."""
    k = pl.program_id(1)

    @pl.when(k == 0)
    def _init():
        acc_ref[...] = jnp.zeros_like(acc_ref)

    # (tm, Dp) bf16 @ (Dp, th) bf16 -> (tm, th) f32 on the MXU.
    h = jnp.dot(x_ref[...], w1_ref[...], preferred_element_type=jnp.float32)
    h = h + b1_ref[...]
    # exact erf-based GELU (matches torch.nn.functional.gelu default)
    h = 0.5 * h * (1.0 + jax.lax.erf(h * _INV_SQRT2))
    # (tm, th) @ (th, Dp) -> accumulate into the f32 VMEM scratch.
    acc_ref[...] += jnp.dot(h.astype(w2_ref.dtype), w2_ref[...],
                            preferred_element_type=jnp.float32)

    @pl.when(k == pl.num_programs(1) - 1)
    def _finalize():
        o_ref[...] = (acc_ref[...] + b2_ref[...]).astype(o_ref.dtype)


def _round_up(x, m):
    return ((x + m - 1) // m) * m


def _pad_to(a, shape):
    if a.shape == shape:
        return a
    return jnp.pad(a, [(0, s - d) for d, s in zip(a.shape, shape)])


def cond_feed_forward(inp, params, *, tm=256, th=512,
                      compute_dtype=jnp.bfloat16, interpret=False):
    """inp = (x, task_id), x (M, D); params = dict(w1 (D,H), b1 (H,), w2 (H,D), b2 (D,)).
    Returns (y, task_id), y (M, D) in x.dtype."""
    x, task_id = inp
    w1 = params["w1"]
    b1 = params["b1"].reshape(1, -1)
    w2 = params["w2"]
    b2 = params["b2"].reshape(1, -1)
    M, D = x.shape
    H = w1.shape[1]
    out_dtype = x.dtype

    # ---- tile sizing --------------------------------------------------------
    # Row tile: multiple of 8 sublanes, never exceeding the 8-aligned token count.
    tm = max(8, (tm // 8) * 8)
    tm = min(tm, _round_up(M, 8))
    M_p = _round_up(M, tm)
    # Model dim padded to 128 lanes -> lane-dense loads and unmasked output stores.
    D_p = _round_up(D, 128)
    # Hidden chunk: largest multiple of 128 that divides the padded H and <= requested th.
    H_p = _round_up(H, 128)
    th_eff = 128
    cand = max(128, (min(th, H_p) // 128) * 128)
    while cand >= 128:
        if H_p % cand == 0:
            th_eff = cand
            break
        cand -= 128
    th = th_eff
    grid = (M_p // tm, H_p // th)

    # ---- pad + cast at the pallas_call boundary (all padding is exact) ------
    xp = _pad_to(x.astype(compute_dtype), (M_p, D_p))
    w1p = _pad_to(w1.astype(compute_dtype), (D_p, H_p))
    b1p = _pad_to(b1.astype(jnp.float32), (1, H_p))
    w2p = _pad_to(w2.astype(compute_dtype), (H_p, D_p))
    b2p = _pad_to(b2.astype(jnp.float32), (1, D_p))

    # ---- VMEM budget (double-buffered streams + accumulator), v7x-safe ------
    bpe = jnp.dtype(compute_dtype).itemsize
    vmem_need = (
        2 * tm * D_p * bpe                               # x row tile
        + 2 * D_p * th * bpe                             # W1 column panel (streamed)
        + 2 * th * D_p * bpe                             # W2 row panel (streamed)
        + 2 * (th + D_p) * 4                             # biases (f32)
        + 2 * tm * D_p * jnp.dtype(out_dtype).itemsize   # output tile
        + tm * D_p * 4                                   # f32 accumulator scratch
        + tm * th * 4                                    # live (tm, th) f32 intermediate
    )
    vmem_limit = int(min(max(2 * vmem_need, 32 * 1024 * 1024), 48 * 1024 * 1024))

    y = pl.pallas_call(
        _ffn_kernel,
        out_shape=jax.ShapeDtypeStruct((M_p, D_p), out_dtype),
        grid_spec=pltpu.PrefetchScalarGridSpec(
            num_scalar_prefetch=0,
            grid=grid,
            in_specs=[
                pl.BlockSpec((tm, D_p), lambda i, k: (i, 0)),   # x row tile (reused over k)
                pl.BlockSpec((D_p, th), lambda i, k: (0, k)),   # W1 column panel
                pl.BlockSpec((1, th), lambda i, k: (0, k)),     # b1 chunk
                pl.BlockSpec((th, D_p), lambda i, k: (k, 0)),   # W2 row panel
                pl.BlockSpec((1, D_p), lambda i, k: (0, 0)),    # b2 (constant)
            ],
            out_specs=pl.BlockSpec((tm, D_p), lambda i, k: (i, 0)),
            scratch_shapes=[pltpu.VMEM((tm, D_p), jnp.float32)],
        ),
        compiler_params=pltpu.CompilerParams(
            dimension_semantics=("parallel", "arbitrary"),
            vmem_limit_bytes=vmem_limit,
        ),
        interpret=interpret,
    )(xp, w1p, b1p, w2p, b2p)

    if (M_p, D_p) != (M, D):
        y = y[:M, :D]
    return (y, task_id)


def init_params(key, dim, expansion_factor):
    """Deterministic init mimicking nn.Linear (uniform +-1/sqrt(fan_in)); stored in f32."""
    inner_dim = int(dim * expansion_factor)
    k1, k2, k3, k4 = jax.random.split(key, 4)
    lim1 = 1.0 / math.sqrt(dim)
    lim2 = 1.0 / math.sqrt(inner_dim)
    return {
        "w1": jax.random.uniform(k1, (dim, inner_dim), jnp.float32, -lim1, lim1),
        "b1": jax.random.uniform(k2, (inner_dim,), jnp.float32, -lim1, lim1),
        "w2": jax.random.uniform(k3, (inner_dim, dim), jnp.float32, -lim2, lim2),
        "b2": jax.random.uniform(k4, (dim,), jnp.float32, -lim2, lim2),
    }


def _reference(x, params):
    h = x @ params["w1"] + params["b1"][None, :]
    h = 0.5 * h * (1.0 + jax.lax.erf(h / jnp.sqrt(2.0)))
    return h @ params["w2"] + params["b2"][None, :]


if __name__ == "__main__":
    dim = 32
    expansion_factor = 8.0   # inner_dim = 256 -> exercises the hidden-chunk accumulator
    M = 50                   # ragged token count -> exercises row-tile / lane padding

    key = jax.random.PRNGKey(0)
    kx, kp = jax.random.split(key)
    x = jax.random.normal(kx, (M, dim), jnp.float32)
    task_id = jnp.int32(3)
    params = init_params(kp, dim, expansion_factor)

    y_ref = _reference(x, params)

    # 1) default tiles (tm clamped to token count; single H chunk at this size)
    y, tid_out = cond_feed_forward((x, task_id), params)
    y = jax.block_until_ready(y)
    assert y.shape == x.shape and y.dtype == x.dtype
    # bf16 matmuls with f32 accumulation -> compare vs f32 reference at bf16 tolerance.
    assert jnp.allclose(y, y_ref, atol=2e-2, rtol=2e-2), (
        f"default-tile mismatch, max abs err={float(jnp.max(jnp.abs(y - y_ref)))}")
    assert int(tid_out) == int(task_id)

    # 2) small tiles -> multi-step grid (4 row tiles x 2 hidden chunks) exercises the
    #    pl.when init/finalize accumulator path and ragged-M padding.
    y2, tid2 = cond_feed_forward((x, task_id), params, tm=16, th=128)
    y2 = jax.block_until_ready(y2)
    assert jnp.allclose(y2, y_ref, atol=2e-2, rtol=2e-2), (
        f"tiled mismatch, max abs err={float(jnp.max(jnp.abs(y2 - y_ref)))}")
    assert int(tid2) == int(task_id)

    print("KERNEL_OK")
</pallas_src>

<mosaic_0001>
module attributes {stable_mosaic.version = 11 : i64} {
  func.func @_ffn_kernel(%arg0: i32, %arg1: i32, %arg2: memref<56x128xbf16, #tpu.memory_space<vmem>>, %arg3: memref<128x256xbf16, #tpu.memory_space<vmem>>, %arg4: memref<1x256xf32, #tpu.memory_space<vmem>>, %arg5: memref<256x128xbf16, #tpu.memory_space<vmem>>, %arg6: memref<1x128xf32, #tpu.memory_space<vmem>>, %arg7: memref<56x128xf32, #tpu.memory_space<vmem>>, %arg8: memref<56x128xf32, #tpu.memory_space<vmem>>) attributes {dimension_semantics = [#tpu.dimension_semantics<parallel>, #tpu.dimension_semantics<arbitrary>], iteration_bounds = array<i64: 1, 1>, scalar_prefetch = 0 : i64, scratch_operands = 1 : i64, tpu.core_type = #tpu.core_type<tc>, window_params = [{transform_indices = @transform_0, window_bounds = array<i64: 56, 128>}, {transform_indices = @transform_1, window_bounds = array<i64: 128, 256>}, {transform_indices = @transform_2, window_bounds = array<i64: 1, 256>}, {transform_indices = @transform_3, window_bounds = array<i64: 256, 128>}, {pipeline_mode = #tpu.pipeline_mode<synchronous>, transform_indices = @transform_4, window_bounds = array<i64: 1, 128>}, {transform_indices = @transform_5, window_bounds = array<i64: 56, 128>}]} {
    %c0_i32 = arith.constant 0 : i32
    %0 = arith.cmpi eq, %arg1, %c0_i32 : i32
    %1 = arith.extui %0 : i1 to i32
    %c0_i32_0 = arith.constant 0 : i32
    %2 = arith.cmpi ne, %1, %c0_i32_0 : i32
    scf.if %2 {
      %cst_18 = arith.constant 0.000000e+00 : f32
      %26 = vector.broadcast %cst_18 : f32 to vector<56x128xf32>
      %c0_19 = arith.constant 0 : index
      %c0_20 = arith.constant 0 : index
      %27 = vector.load %arg8[%c0_19, %c0_20] : memref<56x128xf32, #tpu.memory_space<vmem>>, vector<56x128xf32>
      tpu.vector_store %arg8[%c0_19, %c0_20], %26 {strides = array<i32>} : memref<56x128xf32, #tpu.memory_space<vmem>>, vector<56x128xf32>,
    } else {
    }
    %c0 = arith.constant 0 : index
    %c0_1 = arith.constant 0 : index
    %3 = vector.load %arg2[%c0, %c0_1] : memref<56x128xbf16, #tpu.memory_space<vmem>>, vector<56x128xbf16>
    %c0_2 = arith.constant 0 : index
    %c0_3 = arith.constant 0 : index
    %4 = vector.load %arg3[%c0_2, %c0_3] : memref<128x256xbf16, #tpu.memory_space<vmem>>, vector<128x256xbf16>
    %cst = arith.constant dense<0.000000e+00> : vector<56x256xf32>
    %5 = tpu.matmul %3, %4, %cst {dimension_numbers = #tpu.dot_dimension_numbers<[1], [0], [0], [1], [0, 0, 1, 1], [], []>} : vector<56x128xbf16>, vector<128x256xbf16>, vector<56x256xf32> -> vector<56x256xf32>
    %c0_4 = arith.constant 0 : index
    %c0_5 = arith.constant 0 : index
    %6 = vector.load %arg4[%c0_4, %c0_5] : memref<1x256xf32, #tpu.memory_space<vmem>>, vector<1x256xf32>
    %7 = vector.broadcast %6 : vector<1x256xf32> to vector<56x256xf32>
    %8 = arith.addf %5, %7 : vector<56x256xf32>
    %cst_6 = arith.constant 5.000000e-01 : f32
    %9 = vector.broadcast %cst_6 : f32 to vector<56x256xf32>
    %10 = arith.mulf %9, %8 : vector<56x256xf32>
    %cst_7 = arith.constant 0.707106769 : f32
    %11 = vector.broadcast %cst_7 : f32 to vector<56x256xf32>
    %12 = arith.mulf %8, %11 : vector<56x256xf32>
    %13 = math.erf %12 : vector<56x256xf32>
    %cst_8 = arith.constant 1.000000e+00 : f32
    %14 = vector.broadcast %cst_8 : f32 to vector<56x256xf32>
    %15 = arith.addf %14, %13 : vector<56x256xf32>
    %16 = arith.mulf %10, %15 : vector<56x256xf32>
    %c0_9 = arith.constant 0 : index
    %c0_10 = arith.constant 0 : index
    %17 = vector.load %arg8[%c0_9, %c0_10] : memref<56x128xf32, #tpu.memory_space<vmem>>, vector<56x128xf32>
    %18 = arith.truncf %16 : vector<56x256xf32> to vector<56x256xbf16>
    %c0_11 = arith.constant 0 : index
    %c0_12 = arith.constant 0 : index
    %19 = vector.load %arg5[%c0_11, %c0_12] : memref<256x128xbf16, #tpu.memory_space<vmem>>, vector<256x128xbf16>
    %cst_13 = arith.constant dense<0.000000e+00> : vector<56x128xf32>
    %20 = tpu.matmul %18, %19, %cst_13 {dimension_numbers = #tpu.dot_dimension_numbers<[1], [0], [0], [1], [0, 0, 1, 1], [], []>} : vector<56x256xbf16>, vector<256x128xbf16>, vector<56x128xf32> -> vector<56x128xf32>
    %21 = arith.addf %17, %20 : vector<56x128xf32>
    %c0_14 = arith.constant 0 : index
    %c0_15 = arith.constant 0 : index
    %22 = vector.load %arg8[%c0_14, %c0_15] : memref<56x128xf32, #tpu.memory_space<vmem>>, vector<56x128xf32>
    tpu.vector_store %arg8[%c0_14, %c0_15], %21 {strides = array<i32>} : memref<56x128xf32, #tpu.memory_space<vmem>>, vector<56x128xf32>,
    %c0_i32_16 = arith.constant 0 : i32
    %23 = arith.cmpi eq, %arg1, %c0_i32_16 : i32
    %24 = arith.extui %23 : i1 to i32
    %c0_i32_17 = arith.constant 0 : i32
    %25 = arith.cmpi ne, %24, %c0_i32_17 : i32
    scf.if %25 {
      %c0_18 = arith.constant 0 : index
      %c0_19 = arith.constant 0 : index
      %26 = vector.load %arg8[%c0_18, %c0_19] : memref<56x128xf32, #tpu.memory_space<vmem>>, vector<56x128xf32>
      %c0_20 = arith.constant 0 : index
      %c0_21 = arith.constant 0 : index
      %27 = vector.load %arg6[%c0_20, %c0_21] : memref<1x128xf32, #tpu.memory_space<vmem>>, vector<1x128xf32>
      %28 = vector.broadcast %27 : vector<1x128xf32> to vector<56x128xf32>
      %29 = arith.addf %26, %28 : vector<56x128xf32>
      %c0_22 = arith.constant 0 : index
      %c0_23 = arith.constant 0 : index
      %30 = vector.load %arg7[%c0_22, %c0_23] : memref<56x128xf32, #tpu.memory_space<vmem>>, vector<56x128xf32>
      tpu.vector_store %arg7[%c0_22, %c0_23], %29 {strides = array<i32>} : memref<56x128xf32, #tpu.memory_space<vmem>>, vector<56x128xf32>,
    } else {
    }
    return
  }
  func.func @transform_0(%arg0: i32, %arg1: i32) -> (i32, i32) {
    %c0_i32 = arith.constant 0 : i32
    %c0_i32_0 = arith.constant 0 : i32
    return %arg0, %c0_i32 : i32, i32
  }
  func.func @transform_1(%arg0: i32, %arg1: i32) -> (i32, i32) {
    %c0_i32 = arith.constant 0 : i32
    %c0_i32_0 = arith.constant 0 : i32
    return %c0_i32, %arg1 : i32, i32
  }
  func.func @transform_2(%arg0: i32, %arg1: i32) -> (i32, i32) {
    %c0_i32 = arith.constant 0 : i32
    %c0_i32_0 = arith.constant 0 : i32
    return %c0_i32, %arg1 : i32, i32
  }
  func.func @transform_3(%arg0: i32, %arg1: i32) -> (i32, i32) {
    %c0_i32 = arith.constant 0 : i32
    %c0_i32_0 = arith.constant 0 : i32
    return %arg1, %c0_i32 : i32, i32
  }
  func.func @transform_4(%arg0: i32, %arg1: i32) -> (i32, i32) {
    %c0_i32 = arith.constant 0 : i32
    %c0_i32_0 = arith.constant 0 : i32
    %c0_i32_1 = arith.constant 0 : i32
    return %c0_i32, %c0_i32_0 : i32, i32
  }
  func.func @transform_5(%arg0: i32, %arg1: i32) -> (i32, i32) {
    %c0_i32 = arith.constant 0 : i32
    %c0_i32_0 = arith.constant 0 : i32
    return %arg0, %c0_i32 : i32, i32
  }
}

</mosaic_0001>

<llo_original>
// kernel: tpu_custom_call.1
$region0: #{tpu_custom_call.1}
  #allocation0 [shape = 'u32[]', space=smem, size = 0x4, offset = 0x4, fixed_abs, tag = 'smem constant byte address 0x4 - core index']
  #allocation1 [shape = 'u32[144,128]{1,0:T(1,128)}', space=vmem, size = 0x12000, scoped, tag = 'internal scratch']
  #allocation2 [shape = 'f32[56,128]{1,0:T(8,128)}', space=vmem, size = 0x7000, scoped, tag = 'scratch operand']
  %s0 = inlined_call_operand.hbm [shape: bf16[56,128], index: 0, kind: input, shape index: {}]
  %s1 = inlined_call_operand.hbm [shape: bf16[128,256], index: 1, kind: input, shape index: {}]
  %s2 = inlined_call_operand.vmem [shape: f32[1,256], index: 2, kind: input, shape index: {}]
  %s3 = inlined_call_operand.hbm [shape: bf16[256,128], index: 3, kind: input, shape index: {}]
  %s4 = inlined_call_operand.vmem [shape: f32[1,128], index: 4, kind: input, shape index: {}]
  %s5 = inlined_call_operand.hbm [shape: f32[56,128], index: 5, kind: output, shape index: {}]
  %s6 = sld [smem:[#allocation0]]
  $region50: #{tpu_custom_call.1} parent=0
    _
  %s8 = ssub.s32 1, %s6
  %s9 = scalar_select 0, %s8, %s6
  $region1: #{tpu_custom_call.1} parent=0
    #allocation3 [shape = 'u8[14336]{0}', space=vmem, size = 0x3800, scoped, tag = 'input window, operand 0, single buffered']
    #allocation4 [shape = 's32[1]{0}', space=sflag, size = 0x4, scoped, tag = 'scoped memory for tpu_custom_call.1']
    #allocation5 [shape = 's32[1]{0}', space=sflag, size = 0x4, scoped, tag = 'scoped memory for tpu_custom_call.1']
    #allocation6 [shape = 'u8[65536]{0}', space=vmem, size = 0x10000, scoped, tag = 'input window, operand 1, single buffered']
    #allocation7 [shape = 's32[1]{0}', space=sflag, size = 0x4, scoped, tag = 'scoped memory for tpu_custom_call.1']
    #allocation8 [shape = 'u8[65536]{0}', space=vmem, size = 0x10000, scoped, tag = 'input window, operand 3, single buffered']
    #allocation9 [shape = 'u8[28672]{0}', space=vmem, size = 0x7000, scoped, tag = 'output window, operand 0, single buffered']
    %10 = vsyncpa [#allocation4], 0
    %11 = vsyncpa [#allocation7], 0
    %12 = vsyncpa [#allocation5], 0
    // Predicated region
    $region2: #{tpu_custom_call.1} parent=1 // pred_check
      _
    $region3: #{tpu_custom_call.1} parent=1 // pred_check_branch
      %14 = sbr.rel (0) target = $region5
    $region4: #{tpu_custom_call.1} parent=1 // pred_region
      %s16 = ssub.s32 448, 448
      %17 = vsyncadd [#allocation4], %s16
      %s18 = sshll.u32 [#allocation3], 4
      %s19 = int_to_ptr.vmem [resolvable:$true] %s18
      %24 = dma.hbm_to_vmem [thread:$0]  %s0, 448, %s19, [#allocation4], 64, 64, 4
    $region5: #{tpu_custom_call.1} parent=1 // pred_fallthru
      _
    // Predicated region
    $region6: #{tpu_custom_call.1} parent=1 // pred_check
      _
    $region7: #{tpu_custom_call.1} parent=1 // pred_check_branch
      %26 = sbr.rel (0) target = $region9
    $region8: #{tpu_custom_call.1} parent=1 // pred_region
      %s28 = ssub.s32 2048, 2048
      %29 = vsyncadd [#allocation7], %s28
      %s30 = sshll.u32 [#allocation6], 4
      %s31 = int_to_ptr.vmem [resolvable:$true] %s30
      %36 = dma.hbm_to_vmem [thread:$0]  %s1, 2048, %s31, [#allocation7], 128, 128, 8
    $region9: #{tpu_custom_call.1} parent=1 // pred_fallthru
      _
    // Predicated region
    $region10: #{tpu_custom_call.1} parent=1 // pred_check
      _
    $region11: #{tpu_custom_call.1} parent=1 // pred_check_branch
      %38 = sbr.rel (0) target = $region13
    $region12: #{tpu_custom_call.1} parent=1 // pred_region
      _
    $region13: #{tpu_custom_call.1} parent=1 // pred_fallthru
      _
    // Predicated region
    $region14: #{tpu_custom_call.1} parent=1 // pred_check
      _
    $region15: #{tpu_custom_call.1} parent=1 // pred_check_branch
      %40 = sbr.rel (0) target = $region17
    $region16: #{tpu_custom_call.1} parent=1 // pred_region
      %s42 = ssub.s32 2048, 2048
      %43 = vsyncadd [#allocation7], %s42
      %s44 = sshll.u32 [#allocation8], 4
      %s45 = int_to_ptr.vmem [resolvable:$true] %s44
      %50 = dma.hbm_to_vmem [thread:$0]  %s3, 2048, %s45, [#allocation7], 64, 64, 4
    $region17: #{tpu_custom_call.1} parent=1 // pred_fallthru
      _
    // Predicated region
    $region18: #{tpu_custom_call.1} parent=1 // pred_check
      _
    $region19: #{tpu_custom_call.1} parent=1 // pred_check_branch
      %52 = sbr.rel (0) target = $region21
    $region20: #{tpu_custom_call.1} parent=1 // pred_region
      _
    $region21: #{tpu_custom_call.1} parent=1 // pred_fallthru
      _
    // Predicated region
    $region22: #{tpu_custom_call.1} parent=1 // pred_check
      _
    $region23: #{tpu_custom_call.1} parent=1 // pred_check_branch
      %54 = sbr.rel (0) target = $region25
    $region24: #{tpu_custom_call.1} parent=1 // pred_region
      %55 = dma.done [#allocation4], 448
    $region25: #{tpu_custom_call.1} parent=1 // pred_fallthru
      _
    // Predicated region
    $region26: #{tpu_custom_call.1} parent=1 // pred_check
      _
    $region27: #{tpu_custom_call.1} parent=1 // pred_check_branch
      %57 = sbr.rel (0) target = $region29
    $region28: #{tpu_custom_call.1} parent=1 // pred_region
      %58 = dma.done [#allocation7], 2048
    $region29: #{tpu_custom_call.1} parent=1 // pred_fallthru
      _
    // Predicated region
    $region30: #{tpu_custom_call.1} parent=1 // pred_check
      _
    $region31: #{tpu_custom_call.1} parent=1 // pred_check_branch
      %60 = sbr.rel (0) target = $region33
    $region32: #{tpu_custom_call.1} parent=1 // pred_region
      %61 = dma.done [#allocation7], 2048
    $region33: #{tpu_custom_call.1} parent=1 // pred_fallthru
      _
    %p63 = scmp.eq.s32.totalorder 0, 0
    // Predicated region
    $region34: #{tpu_custom_call.1} parent=1 // pred_check
      %p64 = pneg %p63
    $region35: #{tpu_custom_call.1} parent=1 // pred_check_branch
      %66 = sbr.rel (%p64) target = $region37
    $region36: #{tpu_custom_call.1} parent=1 // pred_region
      %67 = vst [vmem:[#allocation2] sm:$0xff] 0.0
      %68 = vst [vmem:[#allocation2 + $0x8] sm:$0xff] 0.0
      %69 = vst [vmem:[#allocation2 + $0x10] sm:$0xff] 0.0
      %70 = vst [vmem:[#allocation2 + $0x18] sm:$0xff] 0.0
      %71 = vst [vmem:[#allocation2 + $0x20] sm:$0xff] 0.0
      %72 = vst [vmem:[#allocation2 + $0x28] sm:$0xff] 0.0
      %73 = vst [vmem:[#allocation2 + $0x30] sm:$0xff] 0.0
    $region37: #{tpu_custom_call.1} parent=1 // pred_fallthru
      _
    %v74 = vld [vmem:[#allocation3] sm:$0xf]
    %v75 = vld [vmem:[#allocation3 + $0x4] sm:$0xf]
    %v76 = vld [vmem:[#allocation3 + $0x8] sm:$0xf]
    %v77 = vld [vmem:[#allocation3 + $0xc] sm:$0xf]
    %v78 = vld [vmem:[#allocation3 + $0x10] sm:$0xf]
    %v79 = vld [vmem:[#allocation3 + $0x14] sm:$0xf]
    %v80 = vld [vmem:[#allocation3 + $0x18] sm:$0xf]
    %v81 = vld [vmem:[#allocation6] sm:$0xff]
    %v82 = vld [vmem:[#allocation6 + $0x8] sm:$0xff]
    %v83 = vld [vmem:[#allocation6 + $0x10] sm:$0xff]
    %v84 = vld [vmem:[#allocation6 + $0x18] sm:$0xff]
    %v85 = vld [vmem:[#allocation6 + $0x20] sm:$0xff]
    %v86 = vld [vmem:[#allocation6 + $0x28] sm:$0xff]
    %v87 = vld [vmem:[#allocation6 + $0x30] sm:$0xff]
    %v88 = vld [vmem:[#allocation6 + $0x38] sm:$0xff]
    %v89 = vld [vmem:[#allocation6 + $0x40] sm:$0xff]
    %v90 = vld [vmem:[#allocation6 + $0x48] sm:$0xff]
    %v91 = vld [vmem:[#allocation6 + $0x50] sm:$0xff]
    %v92 = vld [vmem:[#allocation6 + $0x58] sm:$0xff]
    %v93 = vld [vmem:[#allocation6 + $0x60] sm:$0xff]
    %v94 = vld [vmem:[#allocation6 + $0x68] sm:$0xff]
    %v95 = vld [vmem:[#allocation6 + $0x70] sm:$0xff]
    %v96 = vld [vmem:[#allocation6 + $0x78] sm:$0xff]
    %v97 = vld [vmem:[%s2] sm:$0x3]
    %v99 = vlaneseq
    %v100 = vshrl.u32 %v99, 7
    %v101 = vsub.s32 0, %v100
    %v102 = vrot.slane %v97, %v101
    %v103 = vlaneseq
    %v104 = vshrl.u32 %v103, 7
    %v105 = vsub.s32 1, %v104
    %v106 = vrot.slane %v97, %v105
    %v116 = vunpack.c.l.b16 %v74
    %v117 = vunpack.c.l.b16 %v75
    %v118 = vunpack.c.l.b16 %v76
    %v119 = vunpack.c.l.b16 %v77
    %v120 = vunpack.c.l.b16 %v78
    %v121 = vunpack.c.l.b16 %v79
    %v122 = vunpack.c.l.b16 %v80
    %v123 = vpack.c.b16 %v117, %v116
    %v124 = vpack.c.b16 %v119, %v118
    %v125 = vpack.c.b16 %v121, %v120
    %v126 = vpack.c.b16 %v122, %v122
    %v147 = vunpack.c.l.b16 %v81
    %v148 = vunpack.c.h.b16 %v81
    %v149 = vunpack.c.l.b16 %v82
    %v150 = vunpack.c.h.b16 %v82
    %v151 = vunpack.c.l.b16 %v83
    %v152 = vunpack.c.h.b16 %v83
    %v153 = vunpack.c.l.b16 %v84
    %v154 = vunpack.c.h.b16 %v84
    %v155 = vunpack.c.l.b16 %v85
    %v156 = vunpack.c.h.b16 %v85
    %v157 = vunpack.c.l.b16 %v86
    %v158 = vunpack.c.h.b16 %v86
    %v159 = vunpack.c.l.b16 %v87
    %v160 = vunpack.c.h.b16 %v87
    %v161 = vunpack.c.l.b16 %v88
    %v162 = vunpack.c.h.b16 %v88
    %v163 = vunpack.c.l.b16 %v89
    %v164 = vunpack.c.h.b16 %v89
    %v165 = vunpack.c.l.b16 %v90
    %v166 = vunpack.c.h.b16 %v90
    %v167 = vunpack.c.l.b16 %v91
    %v168 = vunpack.c.h.b16 %v91
    %v169 = vunpack.c.l.b16 %v92
    %v170 = vunpack.c.h.b16 %v92
    %v171 = vunpack.c.l.b16 %v93
    %v172 = vunpack.c.h.b16 %v93
    %v173 = vunpack.c.l.b16 %v94
    %v174 = vunpack.c.h.b16 %v94
    %v175 = vunpack.c.l.b16 %v95
    %v176 = vunpack.c.h.b16 %v95
    %v177 = vunpack.c.l.b16 %v96
    %v178 = vunpack.c.h.b16 %v96
    %v179 = vpack.c.b16 %v149, %v147
    %v180 = vpack.c.b16 %v150, %v148
    %v181 = vpack.c.b16 %v153, %v151
    %v182 = vpack.c.b16 %v154, %v152
    %v183 = vpack.c.b16 %v157, %v155
    %v184 = vpack.c.b16 %v158, %v156
    %v185 = vpack.c.b16 %v161, %v159
    %v186 = vpack.c.b16 %v162, %v160
    %v187 = vpack.c.b16 %v165, %v163
    %v188 = vpack.c.b16 %v166, %v164
    %v189 = vpack.c.b16 %v169, %v167
    %v190 = vpack.c.b16 %v170, %v168
    %v191 = vpack.c.b16 %v173, %v171
    %v192 = vpack.c.b16 %v174, %v172
    %v193 = vpack.c.b16 %v177, %v175
    %v194 = vpack.c.b16 %v178, %v176
    %211 = vmatprep.subr.bf16.mxu0 %v194
    %212 = vmatpush1.bf16.msra.mxu0 %v193
    %213 = vmatprep.subr.bf16.mxu0 %v192
    %214 = vmatpush1.bf16.msra.mxu0 %v191
    %215 = vmatprep.subr.bf16.mxu0 %v190
    %216 = vmatpush1.bf16.msra.mxu0 %v189
    %217 = vmatprep.subr.bf16.mxu0 %v188
    %218 = vmatpush1.bf16.msra.mxu0 %v187
    %219 = vmatprep.subr.bf16.mxu0 %v186
    %220 = vmatpush1.bf16.msra.mxu0 %v185
    %221 = vmatprep.subr.bf16.mxu0 %v184
    %222 = vmatpush1.bf16.msra.mxu0 %v183
    %223 = vmatprep.subr.bf16.mxu0 %v182
    %224 = vmatpush1.bf16.msra.mxu0 %v181
    %225 = vmatprep.subr.bf16.mxu0 %v180
    %226 = vmatpush1.bf16.msra.mxu0 %v179
    %227 = vmatprep.subr.bf16.mxu0 0
    %228 = vmatpush2.bf16.msra.mxu0 0
    %229 = vmatprep.subr.bf16.mxu0 0
    %230 = vmatpush2.bf16.msra.mxu0 0
    %231 = vmatprep.subr.bf16.mxu0 0
    %232 = vmatpush2.bf16.msra.mxu0 0
    %233 = vmatprep.subr.bf16.mxu0 0
    %234 = vmatpush2.bf16.msra.mxu0 0
    %235 = vmatprep.subr.bf16.mxu0 0
    %236 = vmatpush2.bf16.msra.mxu0 0
    %237 = vmatprep.subr.bf16.mxu0 0
    %238 = vmatpush2.bf16.msra.mxu0 0
    %239 = vmatprep.subr.bf16.mxu0 0
    %240 = vmatpush2.bf16.msra.mxu0 0
    %241 = vmatprep.subr.bf16.mxu0 0
    %242 = vmatpush2.bf16.msra.mxu0 0
    %243 = vmatprep.mubr.bf16.mxu0 0
    %244 = vmatmul.mubr.bf16.gmra.mxu0 %v123
    %v245 = vpop.f32.mrf.mxu0
    %v246 = vadd.f32 %v102, %v245
    %v247 = vpop.f32.mrf.mxu0
    %v248 = vadd.f32 %v106, %v247
    %v249 = vpop.f32.mrf.mxu0
    %v250 = vadd.f32 %v102, %v249
    %v251 = vpop.f32.mrf.mxu0
    %v252 = vadd.f32 %v106, %v251
    %253 = vmatprep.mubr.bf16.mxu0 0
    %254 = vmatmul.mubr.bf16.gmra.mxu0 %v124
    %v255 = vpop.f32.mrf.mxu0
    %v256 = vadd.f32 %v102, %v255
    %v257 = vpop.f32.mrf.mxu0
    %v258 = vadd.f32 %v106, %v257
    %v259 = vpop.f32.mrf.mxu0
    %v260 = vadd.f32 %v102, %v259
    %v261 = vpop.f32.mrf.mxu0
    %v262 = vadd.f32 %v106, %v261
    %263 = vmatprep.mubr.bf16.mxu0 0
    %264 = vmatmul.mubr.bf16.gmra.mxu0 %v125
    %v265 = vpop.f32.mrf.mxu0
    %v266 = vadd.f32 %v102, %v265
    %v267 = vpop.f32.mrf.mxu0
    %v268 = vadd.f32 %v106, %v267
    %v269 = vpop.f32.mrf.mxu0
    %v270 = vadd.f32 %v102, %v269
    %v271 = vpop.f32.mrf.mxu0
    %v272 = vadd.f32 %v106, %v271
    %273 = vmatprep.mubr.bf16.mxu0 0
    %274 = vmatmul.mubr.bf16.gmra.mxu0 %v126
    %v275 = vpop.f32.mrf.mxu0
    %v276 = vadd.f32 %v102, %v275
    %v277 = vpop.f32.mrf.mxu0
    %v278 = vadd.f32 %v106, %v277
    %v279 = vpop.f32.mrf.mxu0
    %v280 = vpop.f32.mrf.mxu0
    %281 = vdwg.mxu0
    %v282 = vmul.f32 %v246, 0.5
    %v283 = vmul.f32 %v248, 0.5
    %v284 = vmul.f32 %v250, 0.5
    %v285 = vmul.f32 %v252, 0.5
    %v286 = vmul.f32 %v256, 0.5
    %v287 = vmul.f32 %v258, 0.5
    %v288 = vmul.f32 %v260, 0.5
    %v289 = vmul.f32 %v262, 0.5
    %v290 = vmul.f32 %v266, 0.5
    %v291 = vmul.f32 %v268, 0.5
    %v292 = vmul.f32 %v270, 0.5
    %v293 = vmul.f32 %v272, 0.5
    %v294 = vmul.f32 %v276, 0.5
    %v295 = vmul.f32 %v278, 0.5
    %v296 = vmul.f32 %v246, 0.70710677
    %v297 = vmul.f32 %v248, 0.70710677
    %v298 = vmul.f32 %v250, 0.70710677
    %v299 = vmul.f32 %v252, 0.70710677
    %v300 = vmul.f32 %v256, 0.70710677
    %v301 = vmul.f32 %v258, 0.70710677
    %v302 = vmul.f32 %v260, 0.70710677
    %v303 = vmul.f32 %v262, 0.70710677
    %v304 = vmul.f32 %v266, 0.70710677
    %v305 = vmul.f32 %v268, 0.70710677
    %v306 = vmul.f32 %v270, 0.70710677
    %v307 = vmul.f32 %v272, 0.70710677
    %v308 = vmul.f32 %v276, 0.70710677
    %v309 = vmul.f32 %v278, 0.70710677
    %v310 = verf.f32.pop %v296
    %v311 = verf.f32.pop %v297
    %v312 = verf.f32.pop %v298
    %v313 = verf.f32.pop %v299
    %v314 = verf.f32.pop %v300
    %v315 = verf.f32.pop %v301
    %v316 = verf.f32.pop %v302
    %v317 = verf.f32.pop %v303
    %v318 = verf.f32.pop %v304
    %v319 = verf.f32.pop %v305
    %v320 = verf.f32.pop %v306
    %v321 = verf.f32.pop %v307
    %v322 = verf.f32.pop %v308
    %v323 = verf.f32.pop %v309
    %v324 = vadd.f32 %v310, 1.0
    %v325 = vadd.f32 %v311, 1.0
    %v326 = vadd.f32 %v312, 1.0
    %v327 = vadd.f32 %v313, 1.0
    %v328 = vadd.f32 %v314, 1.0
    %v329 = vadd.f32 %v315, 1.0
    %v330 = vadd.f32 %v316, 1.0
    %v331 = vadd.f32 %v317, 1.0
    %v332 = vadd.f32 %v318, 1.0
    %v333 = vadd.f32 %v319, 1.0
    %v334 = vadd.f32 %v320, 1.0
    %v335 = vadd.f32 %v321, 1.0
    %v336 = vadd.f32 %v322, 1.0
    %v337 = vadd.f32 %v323, 1.0
    %v338 = vmul.f32 %v282, %v324
    %v339 = vmul.f32 %v283, %v325
    %v340 = vmul.f32 %v284, %v326
    %v341 = vmul.f32 %v285, %v327
    %v342 = vmul.f32 %v286, %v328
    %v343 = vmul.f32 %v287, %v329
    %v344 = vmul.f32 %v288, %v330
    %v345 = vmul.f32 %v289, %v331
    %v346 = vmul.f32 %v290, %v332
    %v347 = vmul.f32 %v291, %v333
    %v348 = vmul.f32 %v292, %v334
    %v349 = vmul.f32 %v293, %v335
    %v350 = vmul.f32 %v294, %v336
    %v351 = vmul.f32 %v295, %v337
    %v352 = vld [vmem:[#allocation2] sm:$0xff]
    %v353 = vld [vmem:[#allocation2 + $0x8] sm:$0xff]
    %v354 = vld [vmem:[#allocation2 + $0x10] sm:$0xff]
    %v355 = vld [vmem:[#allocation2 + $0x18] sm:$0xff]
    %v356 = vld [vmem:[#allocation2 + $0x20] sm:$0xff]
    %v357 = vld [vmem:[#allocation2 + $0x28] sm:$0xff]
    %v358 = vld [vmem:[#allocation2 + $0x30] sm:$0xff]
    %v359 = vpack.c.bf16 %v340, %v338
    %v360 = vpack.c.bf16 %v341, %v339
    %v361 = vpack.c.bf16 %v344, %v342
    %v362 = vpack.c.bf16 %v345, %v343
    %v363 = vpack.c.bf16 %v348, %v346
    %v364 = vpack.c.bf16 %v349, %v347
    %v365 = vpack.c.bf16 %v350, %v350
    %v366 = vpack.c.bf16 %v351, %v351
    %v367 = vld [vmem:[#allocation8] sm:$0xf]
    %v368 = vld [vmem:[#allocation8 + $0x4] sm:$0xf]
    %v369 = vld [vmem:[#allocation8 + $0x8] sm:$0xf]
    %v370 = vld [vmem:[#allocation8 + $0xc] sm:$0xf]
    %v371 = vld [vmem:[#allocation8 + $0x10] sm:$0xf]
    %v372 = vld [vmem:[#allocation8 + $0x14] sm:$0xf]
    %v373 = vld [vmem:[#allocation8 + $0x18] sm:$0xf]
    %v374 = vld [vmem:[#allocation8 + $0x1c] sm:$0xf]
    %v375 = vld [vmem:[#allocation8 + $0x20] sm:$0xf]
    %v376 = vld [vmem:[#allocation8 + $0x24] sm:$0xf]
    %v377 = vld [vmem:[#allocation8 + $0x28] sm:$0xf]
    %v378 = vld [vmem:[#allocation8 + $0x2c] sm:$0xf]
    %v379 = vld [vmem:[#allocation8 + $0x30] sm:$0xf]
    %v380 = vld [vmem:[#allocation8 + $0x34] sm:$0xf]
    %v381 = vld [vmem:[#allocation8 + $0x38] sm:$0xf]
    %v382 = vld [vmem:[#allocation8 + $0x3c] sm:$0xf]
    %v383 = vld [vmem:[#allocation8 + $0x40] sm:$0xf]
    %v384 = vld [vmem:[#allocation8 + $0x44] sm:$0xf]
    %v385 = vld [vmem:[#allocation8 + $0x48] sm:$0xf]
    %v386 = vld [vmem:[#allocation8 + $0x4c] sm:$0xf]
    %v387 = vld [vmem:[#allocation8 + $0x50] sm:$0xf]
    %v388 = vld [vmem:[#allocation8 + $0x54] sm:$0xf]
    %v389 = vld [vmem:[#allocation8 + $0x58] sm:$0xf]
    %v390 = vld [vmem:[#allocation8 + $0x5c] sm:$0xf]
    %v391 = vld [vmem:[#allocation8 + $0x60] sm:$0xf]
    %v392 = vld [vmem:[#allocation8 + $0x64] sm:$0xf]
    %v393 = vld [vmem:[#allocation8 + $0x68] sm:$0xf]
    %v394 = vld [vmem:[#allocation8 + $0x6c] sm:$0xf]
    %v395 = vld [vmem:[#allocation8 + $0x70] sm:$0xf]
    %v396 = vld [vmem:[#allocation8 + $0x74] sm:$0xf]
    %v397 = vld [vmem:[#allocation8 + $0x78] sm:$0xf]
    %v398 = vld [vmem:[#allocation8 + $0x7c] sm:$0xf]
    %v431 = vunpack.c.l.b16 %v367
    %v432 = vunpack.c.l.b16 %v368
    %v433 = vunpack.c.l.b16 %v369
    %v434 = vunpack.c.l.b16 %v370
    %v435 = vunpack.c.l.b16 %v371
    %v436 = vunpack.c.l.b16 %v372
    %v437 = vunpack.c.l.b16 %v373
    %v438 = vunpack.c.l.b16 %v374
    %v439 = vunpack.c.l.b16 %v375
    %v440 = vunpack.c.l.b16 %v376
    %v441 = vunpack.c.l.b16 %v377
    %v442 = vunpack.c.l.b16 %v378
    %v443 = vunpack.c.l.b16 %v379
    %v444 = vunpack.c.l.b16 %v380
    %v445 = vunpack.c.l.b16 %v381
    %v446 = vunpack.c.l.b16 %v382
    %v447 = vunpack.c.l.b16 %v383
    %v448 = vunpack.c.l.b16 %v384
    %v449 = vunpack.c.l.b16 %v385
    %v450 = vunpack.c.l.b16 %v386
    %v451 = vunpack.c.l.b16 %v387
    %v452 = vunpack.c.l.b16 %v388
    %v453 = vunpack.c.l.b16 %v389
    %v454 = vunpack.c.l.b16 %v390
    %v455 = vunpack.c.l.b16 %v391
    %v456 = vunpack.c.l.b16 %v392
    %v457 = vunpack.c.l.b16 %v393
    %v458 = vunpack.c.l.b16 %v394
    %v459 = vunpack.c.l.b16 %v395
    %v460 = vunpack.c.l.b16 %v396
    %v461 = vunpack.c.l.b16 %v397
    %v462 = vunpack.c.l.b16 %v398
    %v463 = vpack.c.b16 %v432, %v431
    %v464 = vpack.c.b16 %v434, %v433
    %v465 = vpack.c.b16 %v436, %v435
    %v466 = vpack.c.b16 %v438, %v437
    %v467 = vpack.c.b16 %v440, %v439
    %v468 = vpack.c.b16 %v442, %v441
    %v469 = vpack.c.b16 %v444, %v443
    %v470 = vpack.c.b16 %v446, %v445
    %v471 = vpack.c.b16 %v448, %v447
    %v472 = vpack.c.b16 %v450, %v449
    %v473 = vpack.c.b16 %v452, %v451
    %v474 = vpack.c.b16 %v454, %v453
    %v475 = vpack.c.b16 %v456, %v455
    %v476 = vpack.c.b16 %v458, %v457
    %v477 = vpack.c.b16 %v460, %v459
    %v478 = vpack.c.b16 %v462, %v461
    %495 = vmatprep.subr.bf16.mxu0 0
    %496 = vmatpush1.bf16.msra.mxu0 %v470
    %497 = vmatprep.subr.bf16.mxu0 0
    %498 = vmatpush1.bf16.msra.mxu0 %v469
    %499 = vmatprep.subr.bf16.mxu0 0
    %500 = vmatpush1.bf16.msra.mxu0 %v468
    %501 = vmatprep.subr.bf16.mxu0 0
    %502 = vmatpush1.bf16.msra.mxu0 %v467
    %503 = vmatprep.subr.bf16.mxu0 0
    %504 = vmatpush1.bf16.msra.mxu0 %v466
    %505 = vmatprep.subr.bf16.mxu0 0
    %506 = vmatpush1.bf16.msra.mxu0 %v465
    %507 = vmatprep.subr.bf16.mxu0 0
    %508 = vmatpush1.bf16.msra.mxu0 %v464
    %509 = vmatprep.subr.bf16.mxu0 0
    %510 = vmatpush1.bf16.msra.mxu0 %v463
    %511 = vmatprep.subr.bf16.mxu0 0
    %512 = vmatpush2.bf16.msra.mxu0 %v478
    %513 = vmatprep.subr.bf16.mxu0 0
    %514 = vmatpush2.bf16.msra.mxu0 %v477
    %515 = vmatprep.subr.bf16.mxu0 0
    %516 = vmatpush2.bf16.msra.mxu0 %v476
    %517 = vmatprep.subr.bf16.mxu0 0
    %518 = vmatpush2.bf16.msra.mxu0 %v475
    %519 = vmatprep.subr.bf16.mxu0 0
    %520 = vmatpush2.bf16.msra.mxu0 %v474
    %521 = vmatprep.subr.bf16.mxu0 0
    %522 = vmatpush2.bf16.msra.mxu0 %v473
    %523 = vmatprep.subr.bf16.mxu0 0
    %524 = vmatpush2.bf16.msra.mxu0 %v472
    %525 = vmatprep.subr.bf16.mxu0 0
    %526 = vmatpush2.bf16.msra.mxu0 %v471
    %527 = vmatprep.mubr.bf16.mxu0 %v360
    %528 = vmatmul.mubr.bf16.gmra.mxu0 %v359
    %v529 = vpop.f32.mrf.mxu0
    %v530 = vadd.f32 0.0, %v529
    %v531 = vpop.f32.mrf.mxu0
    %v532 = vpop.f32.mrf.mxu0
    %v533 = vadd.f32 0.0, %v532
    %v534 = vpop.f32.mrf.mxu0
    %535 = vmatprep.mubr.bf16.mxu0 %v362
    %536 = vmatmul.mubr.bf16.gmra.mxu0 %v361
    %v537 = vpop.f32.mrf.mxu0
    %v538 = vadd.f32 0.0, %v537
    %v539 = vpop.f32.mrf.mxu0
    %v540 = vpop.f32.mrf.mxu0
    %v541 = vadd.f32 0.0, %v540
    %v542 = vpop.f32.mrf.mxu0
    %543 = vmatprep.mubr.bf16.mxu0 %v364
    %544 = vmatmul.mubr.bf16.gmra.mxu0 %v363
    %v545 = vpop.f32.mrf.mxu0
    %v546 = vadd.f32 0.0, %v545
    %v547 = vpop.f32.mrf.mxu0
    %v548 = vpop.f32.mrf.mxu0
    %v549 = vadd.f32 0.0, %v548
    %v550 = vpop.f32.mrf.mxu0
    %551 = vmatprep.mubr.bf16.mxu0 %v366
    %552 = vmatmul.mubr.bf16.gmra.mxu0 %v365
    %v553 = vpop.f32.mrf.mxu0
    %v554 = vadd.f32 0.0, %v553
    %v555 = vpop.f32.mrf.mxu0
    %v556 = vpop.f32.mrf.mxu0
    %v557 = vpop.f32.mrf.mxu0
    %558 = vdwg.mxu0
    %v559 = vadd.f32 %v352, %v530
    %v560 = vadd.f32 %v353, %v533
    %v561 = vadd.f32 %v354, %v538
    %v562 = vadd.f32 %v355, %v541
    %v563 = vadd.f32 %v356, %v546
    %v564 = vadd.f32 %v357, %v549
    %v565 = vadd.f32 %v358, %v554
    %566 = vst [vmem:[#allocation2] sm:$0xff] %v559
    %567 = vst [vmem:[#allocation2 + $0x8] sm:$0xff] %v560
    %568 = vst [vmem:[#allocation2 + $0x10] sm:$0xff] %v561
    %569 = vst [vmem:[#allocation2 + $0x18] sm:$0xff] %v562
    %570 = vst [vmem:[#allocation2 + $0x20] sm:$0xff] %v563
    %571 = vst [vmem:[#allocation2 + $0x28] sm:$0xff] %v564
    %572 = vst [vmem:[#allocation2 + $0x30] sm:$0xff] %v565
    // Predicated region
    $region38: #{tpu_custom_call.1} parent=1 // pred_check
      %p573 = pneg %p63
    $region39: #{tpu_custom_call.1} parent=1 // pred_check_branch
      %575 = sbr.rel (%p573) target = $region41
    $region40: #{tpu_custom_call.1} parent=1 // pred_region
      %v576 = vld [vmem:[#allocation2] sm:$0xff]
      %v577 = vld [vmem:[#allocation2 + $0x8] sm:$0xff]
      %v578 = vld [vmem:[#allocation2 + $0x10] sm:$0xff]
      %v579 = vld [vmem:[#allocation2 + $0x18] sm:$0xff]
      %v580 = vld [vmem:[#allocation2 + $0x20] sm:$0xff]
      %v581 = vld [vmem:[#allocation2 + $0x28] sm:$0xff]
      %v582 = vld [vmem:[#allocation2 + $0x30] sm:$0xff]
      %v583 = vld [vmem:[%s4] sm:$0x1]
      %v585 = vlaneseq
      %v586 = vshrl.u32 %v585, 7
      %v587 = vsub.s32 0, %v586
      %v588 = vrot.slane %v583, %v587
      %v590 = vadd.f32 %v576, %v588
      %v591 = vadd.f32 %v577, %v588
      %v592 = vadd.f32 %v578, %v588
      %v593 = vadd.f32 %v579, %v588
      %v594 = vadd.f32 %v580, %v588
      %v595 = vadd.f32 %v581, %v588
      %v596 = vadd.f32 %v582, %v588
      %597 = vst [vmem:[#allocation9] sm:$0xff] %v590
      %598 = vst [vmem:[#allocation9 + $0x8] sm:$0xff] %v591
      %599 = vst [vmem:[#allocation9 + $0x10] sm:$0xff] %v592
      %600 = vst [vmem:[#allocation9 + $0x18] sm:$0xff] %v593
      %601 = vst [vmem:[#allocation9 + $0x20] sm:$0xff] %v594
      %602 = vst [vmem:[#allocation9 + $0x28] sm:$0xff] %v595
      %603 = vst [vmem:[#allocation9 + $0x30] sm:$0xff] %v596
    $region41: #{tpu_custom_call.1} parent=1 // pred_fallthru
      _
    // Predicated region
    $region42: #{tpu_custom_call.1} parent=1 // pred_check
      _
    $region43: #{tpu_custom_call.1} parent=1 // pred_check_branch
      %605 = sbr.rel (0) target = $region45
    $region44: #{tpu_custom_call.1} parent=1 // pred_region
      %s607 = ssub.s32 896, 896
      %608 = vsyncadd [#allocation5], %s607
      %s609 = sshll.u32 [#allocation9], 4
      %s610 = int_to_ptr.vmem [resolvable:$true] %s609
      %615 = dma.vmem_to_hbm [thread:$0]  %s610, 896, %s5, [#allocation5], 128, 128, 8
    $region45: #{tpu_custom_call.1} parent=1 // pred_fallthru
      _
    // Predicated region
    $region46: #{tpu_custom_call.1} parent=1 // pred_check
      _
    $region47: #{tpu_custom_call.1} parent=1 // pred_check_branch
      %617 = sbr.rel (0) target = $region49
    $region48: #{tpu_custom_call.1} parent=1 // pred_region
      %618 = dma.done [#allocation5], 896
    $region49: #{tpu_custom_call.1} parent=1 // pred_fallthru
      _
    %619 = vsyncpa [#allocation4], 1
    %620 = vsyncpa [#allocation7], 1
    %621 = vsyncpa [#allocation5], 1

</llo_original>
